<compile_context>
chip_gen: v7x
topology: tpu7x:2x2x1
jax: 0.10.0
libtpu: 0.0.40
codegen_flags: <defaults>
</compile_context>

<pallas_src>
import jax
import jax.numpy as jnp
from jax.experimental import pallas as pl
from jax.experimental.pallas import tpu as pltpu

_MiB = 1024 * 1024
_SMALL_BYPASS_BYTES = 1 * _MiB   # below this x-stream size, XLA's fused
                                 # matmul+bias beats a custom-call boundary.


# ----------------------------- kernel body ---------------------------------

def _dualfc_kernel(x_ref, w_ref, b_ref, o_ref, acc_ref):
    """Grid = (batch tiles, K tiles).  o = x @ w + b, f32 accumulation."""
    k = pl.program_id(1)

    @pl.when(k == 0)
    def _init():
        acc_ref[...] = jnp.zeros_like(acc_ref)

    acc_ref[...] += jnp.dot(x_ref[...], w_ref[...],
                            preferred_element_type=jnp.float32)

    @pl.when(k == pl.num_programs(1) - 1)
    def _finalize():
        o_ref[...] = (acc_ref[...] + b_ref[...]).astype(o_ref.dtype)


# --------------------------- parameter prep --------------------------------

def _round_up(x, m):
    return ((x + m - 1) // m) * m


def prepare_dual_fc_params(weight, bias, compute_dtype=None):
    """One-time prep (do NOT call per forward).

    * transpose W to (F, C) and zero-pad C up to a multiple of 128 so the
      kernel output is lane-dense (unmasked vst),
    * optionally cast the weight to a compute dtype. compute_dtype=None
      auto-selects bf16 for large feature dims (kernel is HBM-bound streaming
      x/W; bf16 halves that traffic, accumulation stays f32),
    * bias is kept f32 and added to the f32 accumulator.

    Returns (w_prepared (F, C_pad), b_prepared (1, C_pad) f32, num_classes).
    """
    C, F = weight.shape
    if compute_dtype is None:
        compute_dtype = (jnp.bfloat16
                         if (weight.dtype == jnp.float32 and F >= 1024)
                         else weight.dtype)
    C_pad = _round_up(max(C, 1), 128)
    w_p = jnp.zeros((F, C_pad), compute_dtype).at[:, :C].set(
        weight.T.astype(compute_dtype))
    b_p = jnp.zeros((1, C_pad), jnp.float32).at[:, :C].set(
        bias.astype(jnp.float32).reshape(1, C))
    return w_p, b_p, C


# --------------------------- tiling / budgets -------------------------------

def _vmem_limit_bytes():
    """Generation-aware scoped-VMEM limit: ~3/4 of per-core VMEM, capped at
    100 MiB (v5e/v6e 128 MiB -> 96 MiB; v7x 64 MiB/TC -> 48 MiB)."""
    cap = None
    try:
        info = pltpu.get_tpu_info()
        for attr in ("vmem_capacity_bytes", "vmem_size_bytes", "vmem_bytes"):
            cap = getattr(info, attr, None)
            if cap:
                break
    except Exception:            # non-TPU tracing / interpret: stay conservative
        cap = None
    if not cap:
        cap = 64 * _MiB          # v7x per-TC size is a safe floor everywhere
    return min(100 * _MiB, (3 * int(cap)) // 4)


def _pick_tb(B, sub, budget_fn, budget_bytes):
    """Batch tile: multiple of the sublane tile, as large as the VMEM budget
    allows, preferring an even number of >= 2 grid steps (v7x megacore)."""
    if B <= sub:
        return B
    b_pad = _round_up(B, sub)
    tb = b_pad
    while tb > sub and budget_fn(tb) > budget_bytes:
        tb = max(sub, _round_up(tb // 2, sub))
    if b_pad >= 2 * sub:
        nb = max(2, pl.cdiv(B, tb))
        if nb % 2:
            nb += 1
        tb_even = max(sub, _round_up(pl.cdiv(B, nb), sub))
        if pl.cdiv(B, tb_even) % 2 == 0 and budget_fn(tb_even) <= budget_bytes:
            tb = tb_even
    return tb


def _choose_tiles(B, F, C_pad, x_item, w_item, out_item, sub,
                  budget_bytes, tk_override=None):
    """Pick (tb, tk).  Prefer tk == F (weight resident, nk == 1); fall back to
    K-tiling (tk a 128-multiple divisor of F) only when the full-F tile would
    force a tiny batch tile."""

    def budget(tb, tk):
        return (2 * tb * tk * x_item          # x tile, double-buffered
                + 2 * tk * C_pad * w_item     # weight tile, double-buffered
                + 2 * tb * C_pad * out_item   # output tile, double-buffered
                + tb * C_pad * 4              # f32 accumulator scratch
                + 2 * C_pad * 4)              # bias

    if tk_override is not None:
        tk = int(tk_override)
        if tk != F and (F % tk or tk % 128):
            raise ValueError("tk must equal F or be a 128-multiple divisor of F")
        return _pick_tb(B, sub, lambda t: budget(t, tk), budget_bytes), tk

    # 1) full-F contraction: weight never re-streamed across the grid.
    tb_full = _pick_tb(B, sub, lambda t: budget(t, F), budget_bytes)
    good_tb = min(256, _round_up(B, sub))
    if budget(tb_full, F) <= budget_bytes and tb_full >= good_tb:
        return tb_full, F

    # 2) K-tiling fallback for very large F (restores large batch tiles).
    best_tb, best_tk = tb_full, F
    for tk in (4096, 2048, 1024, 512, 256, 128):
        if tk >= F or F % tk:
            continue
        tb = _pick_tb(B, sub, lambda t, tk=tk: budget(t, tk), budget_bytes)
        if budget(tb, tk) <= budget_bytes and tb > best_tb:
            best_tb, best_tk = tb, tk
            if tb >= min(512, _round_up(B, sub)):
                break
    # TODO(synk): if F is gigantic AND not divisible by any 128-multiple, we
    # keep tk=F with an 8-row batch tile (correct, but may exceed the budget).
    return best_tb, best_tk


# ------------------------------- wrapper ------------------------------------

def dual_fc(x, w_prepared, b_prepared, num_classes, *, is_dual=True,
            tb=None, tk=None, return_padded=False, small_problem_bypass=True):
    """DualFC forward.  x: (B, F); w_prepared: (F, C_pad); b_prepared: (1, C_pad).

    Returns (x1, x) if is_dual else x1, with x1: (B, num_classes)
    (or (B, C_pad) when return_padded=True so the consumer can fuse the slice).
    """
    B, F = x.shape
    assert w_prepared.ndim == 2 and w_prepared.shape[0] == F, (
        "w_prepared must be (F, C_pad) — call prepare_dual_fc_params once")
    C_pad = w_prepared.shape[1]
    assert C_pad % 128 == 0 and b_prepared.shape == (1, C_pad)
    assert 0 < num_classes <= C_pad

    out_dtype = x.dtype
    # Compute dtype follows the prepared weight (bf16 for large F by default);
    # ideally the caller already produces x in that dtype so this cast fuses
    # with x's producer / is a no-op.
    x_c = x if x.dtype == w_prepared.dtype else x.astype(w_prepared.dtype)

    def _post(y_padded):
        x1 = y_padded if (return_padded or C_pad == num_classes) \
            else y_padded[:, :num_classes]
        return (x1, x) if is_dual else x1

    x_item = jnp.dtype(x_c.dtype).itemsize
    if small_problem_bypass and B * F * x_item < _SMALL_BYPASS_BYTES:
        # Tiny problem (the real fetal-IQA inference case): the custom-call
        # boundary dominates; let XLA fuse the matmul + bias instead.
        y = jnp.dot(x_c, w_prepared,
                    preferred_element_type=jnp.float32) + b_prepared
        return _post(y.astype(out_dtype))

    w_item = jnp.dtype(w_prepared.dtype).itemsize
    out_item = jnp.dtype(out_dtype).itemsize
    sub = {4: 8, 2: 16, 1: 32}.get(x_item, 8)        # sublane tile per dtype

    vmem_limit = _vmem_limit_bytes()
    tile_budget = (17 * vmem_limit) // 20            # ~85%: compiler headroom

    tb_sel, tk_sel = _choose_tiles(B, F, C_pad, x_item, w_item, out_item,
                                   sub, tile_budget, tk_override=tk)
    if tb is not None:                                # caller override (rounded legal)
        tb_sel = B if tb >= B else max(sub, _round_up(min(tb, B), sub))

    nb = pl.cdiv(B, tb_sel)
    nk = 1 if tk_sel == F else F // tk_sel

    cost = pl.CostEstimate(
        flops=2 * B * F * C_pad,
        transcendentals=0,
        bytes_accessed=(B * F * x_item + F * C_pad * w_item
                        + C_pad * 4 + B * C_pad * out_item))

    x1_padded = pl.pallas_call(
        _dualfc_kernel,
        out_shape=jax.ShapeDtypeStruct((B, C_pad), out_dtype),
        grid_spec=pltpu.PrefetchScalarGridSpec(
            num_scalar_prefetch=0,
            grid=(nb, nk),
            in_specs=[
                pl.BlockSpec((tb_sel, tk_sel), lambda i, k: (i, k)),  # x tile
                pl.BlockSpec((tk_sel, C_pad), lambda i, k: (k, 0)),   # weight
                pl.BlockSpec((1, C_pad), lambda i, k: (0, 0)),        # bias
            ],
            out_specs=pl.BlockSpec((tb_sel, C_pad), lambda i, k: (i, 0)),
            scratch_shapes=[pltpu.VMEM((tb_sel, C_pad), jnp.float32)],
        ),
        compiler_params=pltpu.CompilerParams(
            dimension_semantics=("parallel", "arbitrary"),  # batch across v7x cores
            vmem_limit_bytes=vmem_limit),
        cost_estimate=cost,
    )(x_c, w_prepared, b_prepared)

    return _post(x1_padded)


# ------------------------------ reference -----------------------------------

def _ref_dual_fc(x, weight, bias, is_dual=True):
    x1 = x @ weight.T + bias
    return (x1, x) if is_dual else x1


# --------------------------------- test -------------------------------------

if __name__ == "__main__":
    key = jax.random.PRNGKey(0)
    k_x, k_w, k_b, k_x2 = jax.random.split(key, 4)

    # ---- test 1: small f32, single K step (nk == 1) --------------------------
    batch, num_ftrs, num_classes = 8, 32, 8
    x = jax.random.normal(k_x, (batch, num_ftrs), dtype=jnp.float32)
    # PyTorch Linear-layout params: W (C, F), b (C,)
    weight = jax.random.normal(k_w, (num_classes, num_ftrs), jnp.float32) * 0.1
    bias = jax.random.normal(k_b, (num_classes,), jnp.float32) * 0.1

    w_p, b_p, C = prepare_dual_fc_params(weight, bias, compute_dtype=jnp.float32)
    x1, x_out = dual_fc(x, w_p, b_p, C, is_dual=True,
                        small_problem_bypass=False)   # force the Pallas kernel
    jax.block_until_ready((x1, x_out))

    x1_ref, x_ref_out = _ref_dual_fc(x, weight, bias, is_dual=True)
    assert x1.shape == (batch, num_classes)
    assert x_out.shape == (batch, num_ftrs)
    assert jnp.allclose(x1, x1_ref, atol=1e-5, rtol=1e-5)
    assert jnp.allclose(x_out, x_ref_out)

    # ---- test 2: force the K-tiled accumulator path (nk == 2) ----------------
    B2, F2, C2 = 16, 256, 3
    x2 = jax.random.normal(k_x2, (B2, F2), dtype=jnp.float32)
    w2 = jax.random.normal(k_w, (C2, F2), jnp.float32) * 0.1
    b2 = jax.random.normal(k_b, (C2,), jnp.float32) * 0.1
    w2_p, b2_p, _ = prepare_dual_fc_params(w2, b2, compute_dtype=jnp.float32)
    y2 = dual_fc(x2, w2_p, b2_p, C2, is_dual=False,
                 tk=128, small_problem_bypass=False)
    jax.block_until_ready(y2)
    assert y2.shape == (B2, C2)
    assert jnp.allclose(y2, _ref_dual_fc(x2, w2, b2, is_dual=False),
                        atol=1e-4, rtol=1e-4)

    # ---- test 3: bf16 compute path (f32 accumulation, loose tolerance) -------
    w3_p, b3_p, _ = prepare_dual_fc_params(w2, b2, compute_dtype=jnp.bfloat16)
    y3, _ = dual_fc(x2, w3_p, b3_p, C2, is_dual=True,
                    small_problem_bypass=False)
    jax.block_until_ready(y3)
    assert y3.dtype == x2.dtype and y3.shape == (B2, C2)
    assert jnp.allclose(y3, _ref_dual_fc(x2, w2, b2, is_dual=False),
                        atol=1e-1, rtol=1e-1)

    print("KERNEL_OK")
</pallas_src>

<mosaic_0001>
module attributes {stable_mosaic.version = 11 : i64} {
  func.func @_dualfc_kernel(%arg0: i32, %arg1: i32, %arg2: memref<8x32xf32, #tpu.memory_space<vmem>>, %arg3: memref<32x128xf32, #tpu.memory_space<vmem>>, %arg4: memref<1x128xf32, #tpu.memory_space<vmem>>, %arg5: memref<8x128xf32, #tpu.memory_space<vmem>>, %arg6: memref<8x128xf32, #tpu.memory_space<vmem>>) attributes {dimension_semantics = [#tpu.dimension_semantics<parallel>, #tpu.dimension_semantics<arbitrary>], iteration_bounds = array<i64: 1, 1>, scalar_prefetch = 0 : i64, scratch_operands = 1 : i64, tpu.core_type = #tpu.core_type<tc>, window_params = [{transform_indices = @transform_0, window_bounds = array<i64: 8, 32>}, {transform_indices = @transform_1, window_bounds = array<i64: 32, 128>}, {pipeline_mode = #tpu.pipeline_mode<synchronous>, transform_indices = @transform_2, window_bounds = array<i64: 1, 128>}, {transform_indices = @transform_3, window_bounds = array<i64: 8, 128>}]} {
    %c0_i32 = arith.constant 0 : i32
    %0 = arith.cmpi eq, %arg1, %c0_i32 : i32
    %1 = arith.extui %0 : i1 to i32
    %c0_i32_0 = arith.constant 0 : i32
    %2 = arith.cmpi ne, %1, %c0_i32_0 : i32
    scf.if %2 {
      %cst_10 = arith.constant 0.000000e+00 : f32
      %12 = vector.broadcast %cst_10 : f32 to vector<8x128xf32>
      %c0_11 = arith.constant 0 : index
      %c0_12 = arith.constant 0 : index
      %13 = vector.load %arg6[%c0_11, %c0_12] : memref<8x128xf32, #tpu.memory_space<vmem>>, vector<8x128xf32>
      tpu.vector_store %arg6[%c0_11, %c0_12], %12 {strides = array<i32>} : memref<8x128xf32, #tpu.memory_space<vmem>>, vector<8x128xf32>,
    } else {
    }
    %c0 = arith.constant 0 : index
    %c0_1 = arith.constant 0 : index
    %3 = vector.load %arg6[%c0, %c0_1] : memref<8x128xf32, #tpu.memory_space<vmem>>, vector<8x128xf32>
    %c0_2 = arith.constant 0 : index
    %c0_3 = arith.constant 0 : index
    %4 = vector.load %arg2[%c0_2, %c0_3] : memref<8x32xf32, #tpu.memory_space<vmem>>, vector<8x32xf32>
    %c0_4 = arith.constant 0 : index
    %c0_5 = arith.constant 0 : index
    %5 = vector.load %arg3[%c0_4, %c0_5] : memref<32x128xf32, #tpu.memory_space<vmem>>, vector<32x128xf32>
    %cst = arith.constant dense<0.000000e+00> : vector<8x128xf32>
    %6 = tpu.matmul %4, %5, %cst {dimension_numbers = #tpu.dot_dimension_numbers<[1], [0], [0], [1], [0, 0, 1, 1], [], []>} : vector<8x32xf32>, vector<32x128xf32>, vector<8x128xf32> -> vector<8x128xf32>
    %7 = arith.addf %3, %6 : vector<8x128xf32>
    %c0_6 = arith.constant 0 : index
    %c0_7 = arith.constant 0 : index
    %8 = vector.load %arg6[%c0_6, %c0_7] : memref<8x128xf32, #tpu.memory_space<vmem>>, vector<8x128xf32>
    tpu.vector_store %arg6[%c0_6, %c0_7], %7 {strides = array<i32>} : memref<8x128xf32, #tpu.memory_space<vmem>>, vector<8x128xf32>,
    %c0_i32_8 = arith.constant 0 : i32
    %9 = arith.cmpi eq, %arg1, %c0_i32_8 : i32
    %10 = arith.extui %9 : i1 to i32
    %c0_i32_9 = arith.constant 0 : i32
    %11 = arith.cmpi ne, %10, %c0_i32_9 : i32
    scf.if %11 {
      %c0_10 = arith.constant 0 : index
      %c0_11 = arith.constant 0 : index
      %12 = vector.load %arg6[%c0_10, %c0_11] : memref<8x128xf32, #tpu.memory_space<vmem>>, vector<8x128xf32>
      %c0_12 = arith.constant 0 : index
      %c0_13 = arith.constant 0 : index
      %13 = vector.load %arg4[%c0_12, %c0_13] : memref<1x128xf32, #tpu.memory_space<vmem>>, vector<1x128xf32>
      %14 = vector.broadcast %13 : vector<1x128xf32> to vector<8x128xf32>
      %15 = arith.addf %12, %14 : vector<8x128xf32>
      %c0_14 = arith.constant 0 : index
      %c0_15 = arith.constant 0 : index
      %16 = vector.load %arg5[%c0_14, %c0_15] : memref<8x128xf32, #tpu.memory_space<vmem>>, vector<8x128xf32>
      tpu.vector_store %arg5[%c0_14, %c0_15], %15 {strides = array<i32>} : memref<8x128xf32, #tpu.memory_space<vmem>>, vector<8x128xf32>,
    } else {
    }
    return
  }
  func.func @transform_0(%arg0: i32, %arg1: i32) -> (i32, i32) {
    %c0_i32 = arith.constant 0 : i32
    return %arg0, %arg1 : i32, i32
  }
  func.func @transform_1(%arg0: i32, %arg1: i32) -> (i32, i32) {
    %c0_i32 = arith.constant 0 : i32
    %c0_i32_0 = arith.constant 0 : i32
    return %arg1, %c0_i32 : i32, i32
  }
  func.func @transform_2(%arg0: i32, %arg1: i32) -> (i32, i32) {
    %c0_i32 = arith.constant 0 : i32
    %c0_i32_0 = arith.constant 0 : i32
    %c0_i32_1 = arith.constant 0 : i32
    return %c0_i32, %c0_i32_0 : i32, i32
  }
  func.func @transform_3(%arg0: i32, %arg1: i32) -> (i32, i32) {
    %c0_i32 = arith.constant 0 : i32
    %c0_i32_0 = arith.constant 0 : i32
    return %arg0, %c0_i32 : i32, i32
  }
}

</mosaic_0001>

<llo_original>
// kernel: tpu_custom_call.1
$region0: #{tpu_custom_call.1}
  #allocation0 [shape = 'u32[]', space=smem, size = 0x4, offset = 0x4, fixed_abs, tag = 'smem constant byte address 0x4 - core index']
  #allocation1 [shape = 'u32[144,128]{1,0:T(1,128)}', space=vmem, size = 0x12000, scoped, tag = 'internal scratch']
  #allocation2 [shape = 'f32[8,128]{1,0:T(8,128)}', space=vmem, size = 0x1000, scoped, tag = 'scratch operand']
  %s0 = inlined_call_operand.hbm [shape: f32[8,32], index: 0, kind: input, shape index: {}]
  %s1 = inlined_call_operand.hbm [shape: f32[32,128], index: 1, kind: input, shape index: {}]
  %s2 = inlined_call_operand.vmem [shape: f32[1,128], index: 2, kind: input, shape index: {}]
  %s3 = inlined_call_operand.hbm [shape: f32[8,128], index: 3, kind: output, shape index: {}]
  %s4 = sld [smem:[#allocation0]]
  $region38: #{tpu_custom_call.1} parent=0
    _
  %s6 = ssub.s32 1, %s4
  %s7 = scalar_select 0, %s6, %s4
  $region1: #{tpu_custom_call.1} parent=0
    #allocation3 [shape = 'u8[4096]{0}', space=vmem, size = 0x1000, scoped, tag = 'input window, operand 0, single buffered']
    #allocation4 [shape = 's32[1]{0}', space=sflag, size = 0x4, scoped, tag = 'scoped memory for tpu_custom_call.1']
    #allocation5 [shape = 's32[1]{0}', space=sflag, size = 0x4, scoped, tag = 'scoped memory for tpu_custom_call.1']
    #allocation6 [shape = 'u8[16384]{0}', space=vmem, size = 0x4000, scoped, tag = 'input window, operand 1, single buffered']
    #allocation7 [shape = 's32[1]{0}', space=sflag, size = 0x4, scoped, tag = 'scoped memory for tpu_custom_call.1']
    #allocation8 [shape = 'u8[4096]{0}', space=vmem, size = 0x1000, scoped, tag = 'output window, operand 0, single buffered']
    %8 = vsyncpa [#allocation4], 0
    %9 = vsyncpa [#allocation7], 0
    %10 = vsyncpa [#allocation5], 0
    // Predicated region
    $region2: #{tpu_custom_call.1} parent=1 // pred_check
      _
    $region3: #{tpu_custom_call.1} parent=1 // pred_check_branch
      %12 = sbr.rel (0) target = $region5
    $region4: #{tpu_custom_call.1} parent=1 // pred_region
      %s14 = ssub.s32 128, 128
      %15 = vsyncadd [#allocation4], %s14
      %s17 = sshll.u32 [#allocation3], 4
      %s18 = int_to_ptr.vmem [resolvable:$true] %s17
      %20 = dma.hbm_to_vmem [thread:$0]  %s0, 128, %s18, [#allocation4]
    $region5: #{tpu_custom_call.1} parent=1 // pred_fallthru
      _
    // Predicated region
    $region6: #{tpu_custom_call.1} parent=1 // pred_check
      _
    $region7: #{tpu_custom_call.1} parent=1 // pred_check_branch
      %22 = sbr.rel (0) target = $region9
    $region8: #{tpu_custom_call.1} parent=1 // pred_region
      %s24 = ssub.s32 512, 512
      %25 = vsyncadd [#allocation7], %s24
      %s26 = sshll.u32 [#allocation6], 4
      %s27 = int_to_ptr.vmem [resolvable:$true] %s26
      %32 = dma.hbm_to_vmem [thread:$0]  %s1, 512, %s27, [#allocation7], 128, 128, 8
    $region9: #{tpu_custom_call.1} parent=1 // pred_fallthru
      _
    // Predicated region
    $region10: #{tpu_custom_call.1} parent=1 // pred_check
      _
    $region11: #{tpu_custom_call.1} parent=1 // pred_check_branch
      %34 = sbr.rel (0) target = $region13
    $region12: #{tpu_custom_call.1} parent=1 // pred_region
      _
    $region13: #{tpu_custom_call.1} parent=1 // pred_fallthru
      _
    // Predicated region
    $region14: #{tpu_custom_call.1} parent=1 // pred_check
      _
    $region15: #{tpu_custom_call.1} parent=1 // pred_check_branch
      %36 = sbr.rel (0) target = $region17
    $region16: #{tpu_custom_call.1} parent=1 // pred_region
      %37 = dma.done [#allocation4], 128
    $region17: #{tpu_custom_call.1} parent=1 // pred_fallthru
      _
    // Predicated region
    $region18: #{tpu_custom_call.1} parent=1 // pred_check
      _
    $region19: #{tpu_custom_call.1} parent=1 // pred_check_branch
      %39 = sbr.rel (0) target = $region21
    $region20: #{tpu_custom_call.1} parent=1 // pred_region
      %40 = dma.done [#allocation7], 512
    $region21: #{tpu_custom_call.1} parent=1 // pred_fallthru
      _
    %p41 = scmp.eq.s32.totalorder 0, 0
    // Predicated region
    $region22: #{tpu_custom_call.1} parent=1 // pred_check
      %p42 = pneg %p41
    $region23: #{tpu_custom_call.1} parent=1 // pred_check_branch
      %44 = sbr.rel (%p42) target = $region25
    $region24: #{tpu_custom_call.1} parent=1 // pred_region
      %45 = vst [vmem:[#allocation2] sm:$0xff] 0.0
    $region25: #{tpu_custom_call.1} parent=1 // pred_fallthru
      _
    %v46 = vld [vmem:[#allocation2] sm:$0xff]
    %v47 = vld [vmem:[#allocation3] sm:$0xff]
    %v48 = vld [vmem:[#allocation6] sm:$0xff]
    %v49 = vld [vmem:[#allocation6 + $0x8] sm:$0xff]
    %v50 = vld [vmem:[#allocation6 + $0x10] sm:$0xff]
    %v51 = vld [vmem:[#allocation6 + $0x18] sm:$0xff]
    %vm52 = vcmask 261120
    %v54 = vsel %vm52, %v47, 0
    %56 = vmatprep.subr.mxu0 0.0
    %57 = vmatpush1.msra.mxu0 %v48
    %58 = vmatprep.subr.mxu0 0.0
    %59 = vmatpush1.msra.mxu0 %v49
    %60 = vmatprep.subr.mxu0 0.0
    %61 = vmatpush1.msra.mxu0 %v50
    %62 = vmatprep.subr.mxu0 0.0
    %63 = vmatpush1.msra.mxu0 %v51
    %64 = vmatprep.subr.mxu0 0.0
    %65 = vmatpush1.msra.mxu0 0.0
    %66 = vmatprep.subr.mxu0 0.0
    %67 = vmatpush1.msra.mxu0 0.0
    %68 = vmatprep.subr.mxu0 0.0
    %69 = vmatpush1.msra.mxu0 0.0
    %70 = vmatprep.subr.mxu0 0.0
    %71 = vmatpush1.msra.mxu0 0.0
    %72 = vmatprep.subr.mxu0 0.0
    %73 = vmatpush1.msra.mxu0 0.0
    %74 = vmatprep.subr.mxu0 0.0
    %75 = vmatpush1.msra.mxu0 0.0
    %76 = vmatprep.subr.mxu0 0.0
    %77 = vmatpush1.msra.mxu0 0.0
    %78 = vmatprep.subr.mxu0 0.0
    %79 = vmatpush1.msra.mxu0 0.0
    %80 = vmatprep.subr.mxu0 0.0
    %81 = vmatpush1.msra.mxu0 0.0
    %82 = vmatprep.subr.mxu0 0.0
    %83 = vmatpush1.msra.mxu0 0.0
    %84 = vmatprep.subr.mxu0 0.0
    %85 = vmatpush1.msra.mxu0 0.0
    %86 = vmatprep.subr.mxu0 0.0
    %87 = vmatpush1.msra.mxu0 0.0
    %88 = vmatprep.subr.mxu0 0.0
    %89 = vmatpush1.msra.mxu0 0.0
    %90 = vmatprep.subr.mxu0 0.0
    %91 = vmatpush1.msra.mxu0 0.0
    %92 = vmatprep.subr.mxu0 0.0
    %93 = vmatpush1.msra.mxu0 0.0
    %94 = vmatprep.subr.mxu0 0.0
    %95 = vmatpush1.msra.mxu0 0.0
    %96 = vmatprep.subr.mxu0 0.0
    %97 = vmatpush1.msra.mxu0 0.0
    %98 = vmatprep.subr.mxu0 0.0
    %99 = vmatpush1.msra.mxu0 0.0
    %100 = vmatprep.subr.mxu0 0.0
    %101 = vmatpush1.msra.mxu0 0.0
    %102 = vmatprep.subr.mxu0 0.0
    %103 = vmatpush1.msra.mxu0 0.0
    %104 = vmatprep.subr.mxu0 0.0
    %105 = vmatpush1.msra.mxu0 0.0
    %106 = vmatprep.subr.mxu0 0.0
    %107 = vmatpush1.msra.mxu0 0.0
    %108 = vmatprep.subr.mxu0 0.0
    %109 = vmatpush1.msra.mxu0 0.0
    %110 = vmatprep.subr.mxu0 0.0
    %111 = vmatpush1.msra.mxu0 0.0
    %112 = vmatprep.subr.mxu0 0.0
    %113 = vmatpush1.msra.mxu0 0.0
    %114 = vmatprep.subr.mxu0 0.0
    %115 = vmatpush1.msra.mxu0 0.0
    %116 = vmatprep.subr.mxu0 0.0
    %117 = vmatpush1.msra.mxu0 0.0
    %118 = vmatprep.subr.mxu0 0.0
    %119 = vmatpush1.msra.mxu0 0.0
    %120 = vmatprep.mubr.f32.mxu0 0.0
    %121 = vmatmul.mubr.f32.gmra.mrb[0].mxu0 %v54
    %v122 = vpop.f32.mrb[0].mxu0
    %v123 = vadd.f32 0.0, %v122
    %v124 = vpop.f32.mrb[0].mxu0
    %125 = vdwg.mxu0
    %v126 = vadd.f32 %v46, %v123
    %127 = vst [vmem:[#allocation2] sm:$0xff] %v126
    // Predicated region
    $region26: #{tpu_custom_call.1} parent=1 // pred_check
      %p128 = pneg %p41
    $region27: #{tpu_custom_call.1} parent=1 // pred_check_branch
      %130 = sbr.rel (%p128) target = $region29
    $region28: #{tpu_custom_call.1} parent=1 // pred_region
      %v131 = vld [vmem:[#allocation2] sm:$0xff]
      %v132 = vld [vmem:[%s2] sm:$0x1]
      %v134 = vlaneseq
      %v135 = vshrl.u32 %v134, 7
      %v136 = vsub.s32 0, %v135
      %v137 = vrot.slane %v132, %v136
      %v139 = vadd.f32 %v131, %v137
      %140 = vst [vmem:[#allocation8] sm:$0xff] %v139
    $region29: #{tpu_custom_call.1} parent=1 // pred_fallthru
      _
    // Predicated region
    $region30: #{tpu_custom_call.1} parent=1 // pred_check
      _
    $region31: #{tpu_custom_call.1} parent=1 // pred_check_branch
      %142 = sbr.rel (0) target = $region33
    $region32: #{tpu_custom_call.1} parent=1 // pred_region
      %s144 = ssub.s32 128, 128
      %145 = vsyncadd [#allocation5], %s144
      %s147 = sshll.u32 [#allocation8], 4
      %s148 = int_to_ptr.vmem [resolvable:$true] %s147
      %150 = dma.vmem_to_hbm [thread:$0]  %s148, 128, %s3, [#allocation5]
    $region33: #{tpu_custom_call.1} parent=1 // pred_fallthru
      _
    // Predicated region
    $region34: #{tpu_custom_call.1} parent=1 // pred_check
      _
    $region35: #{tpu_custom_call.1} parent=1 // pred_check_branch
      %152 = sbr.rel (0) target = $region37
    $region36: #{tpu_custom_call.1} parent=1 // pred_region
      %153 = dma.done [#allocation5], 128
    $region37: #{tpu_custom_call.1} parent=1 // pred_fallthru
      _
    %154 = vsyncpa [#allocation4], 1
    %155 = vsyncpa [#allocation7], 1
    %156 = vsyncpa [#allocation5], 1

</llo_original>
